<compile_context>
chip_gen: v5e
topology: v5e:2x2
jax: 0.10.0
libtpu: 0.0.40
codegen_flags: <defaults>
</compile_context>

<pallas_src>
import math

import jax
import jax.numpy as jnp
from jax.experimental import pallas as pl
from jax.experimental.pallas import tpu as pltpu


# --------------------------------------------------------------------------------------
# VMEM budgeting helpers
# --------------------------------------------------------------------------------------
def _roundup(x, m):
    return -(-int(x) // m) * m


def _padded_block_bytes(shape, dtype):
    """VMEM bytes of a block including (sublane, lane) padding of the last two dims."""
    itemsize = jnp.dtype(dtype).itemsize
    if len(shape) < 2:
        n = 1
        for d in shape:
            n *= int(d)
        return _roundup(n * itemsize, 512)
    sub_mult = {4: 8, 2: 16, 1: 32}.get(itemsize, 8)
    lead = 1
    for d in shape[:-2]:
        lead *= int(d)
    return lead * _roundup(shape[-2], sub_mult) * _roundup(shape[-1], 128) * itemsize


def _vmem_limit_bytes():
    """Generation-aware VMEM limit: ~96 MiB on 128-MiB parts (v5e/v6e), ~48 MiB on
    64-MiB parts (v7x); conservative 32 MiB if the hardware query is unavailable."""
    try:
        cap = int(pltpu.get_tpu_info().vmem_capacity_bytes)
    except Exception:
        return 32 * 1024 * 1024
    if cap <= 0:
        return 32 * 1024 * 1024
    return min(cap * 3 // 4, 96 * 1024 * 1024)


def _estimate_step_vmem(TN, M, D, C, H, HID, M_total, cd, fused_gather):
    """Rough per-grid-step VMEM: double-buffered pipeline blocks + resident weights +
    in-kernel f32 temporaries, all at padded (sublane, lane) sizes."""
    f32 = jnp.float32
    R = TN * M
    blocks = (_padded_block_bytes((R, D), cd)
              + _padded_block_bytes((TN, C), cd)
              + _padded_block_bytes((TN, M, H), f32))
    if fused_gather:
        blocks += (_padded_block_bytes((TN, M), jnp.int32)
                   + _padded_block_bytes((M_total, C), cd))
    else:
        blocks += _padded_block_bytes((TN, M, C), cd)
    blocks *= 2  # default double buffering
    weights = 2 * (_padded_block_bytes((D, H * HID), cd)
                   + _padded_block_bytes((1, H * HID), f32)
                   + _padded_block_bytes((H * HID, H), f32)
                   + _padded_block_bytes((1, H), f32)
                   + _padded_block_bytes((C, H * C), cd))
    temps = (3 * _padded_block_bytes((R, H * HID), f32)       # h1 / swish stages
             + 2 * _padded_block_bytes((R, C), f32)           # gathered keys (+cast)
             + 2 * _padded_block_bytes((TN, M, C), f32)       # einsum lhs
             + 2 * _padded_block_bytes((TN, H, C), f32)       # reshaped v
             + 3 * _padded_block_bytes((TN, M, H), f32))      # loc / dot / sum
    return blocks + weights + temps


def _choose_row_tile(B, N, M, D, C, H, HID, M_total, cd, vmem_limit, fused_gather):
    """Largest TN (divides N, TN % 8 == 0 or TN == N) whose estimated per-step VMEM fits
    ~80% of the limit; among those prefer tiles keeping the grid even and >= 2 steps so
    both TensorCores stay busy on megacore / v7x."""
    budget = int(0.8 * vmem_limit)
    cands = [t for t in range(1, N + 1) if N % t == 0 and (t % 8 == 0 or t == N)]
    fitting = [t for t in cands
               if _estimate_step_vmem(t, M, D, C, H, HID, M_total, cd, fused_gather)
               <= budget]
    pool = fitting if fitting else [min(cands)]   # nothing fits: smallest legal tile
    even = [t for t in pool if B * (N // t) >= 2 and (B * (N // t)) % 2 == 0]
    return max(even) if even else max(pool)


# --------------------------------------------------------------------------------------
# Kernel bodies
# --------------------------------------------------------------------------------------
def _tile_compute(ploc2, q, kg3, w1, b1, w2sel, b2, a_qk, out_dtype):
    """Shared per-tile math.

    ploc2 : [T*M, D]  (matmul dtype)  flattened pairwise locations
    q     : [T, C]    (matmul dtype)  query features
    kg3   : [T, M, C] (matmul dtype)  neighborhood-gathered key features
    returns [T, M, H] in out_dtype (single layout end-to-end, no transposes).
    """
    T, Mn, C = kg3.shape
    H = b2.shape[-1]

    # location kernel: head-stacked 2-layer MLP (swish); both layers on the MXU.
    h1 = jnp.dot(ploc2, w1, preferred_element_type=jnp.float32) + b1      # [T*M, H*HID]
    act = h1 * jax.nn.sigmoid(h1)                                         # swish, f32 (v5e-safe)
    # second layer + per-head grouped reduce folded into one block-diagonal matmul
    loc = jnp.dot(act, w2sel, preferred_element_type=jnp.float32)         # [T*M, H]
    loc = loc.reshape(T, Mn, H)

    # feature kernel: v = q @ (Wq Wk^T / sqrt(dk)) stacked over heads (one wide matmul),
    # then a batched per-query contraction against the gathered keys.
    # (If a bundle dump shows the tiny batched matmuls saturating the vmatmul-push slot,
    #  switch this contraction to a VPU broadcast-mult + reduce over C.)
    v = jnp.dot(q, a_qk, preferred_element_type=jnp.float32)              # [T, H*C]
    v3 = v.reshape(T, H, C).astype(kg3.dtype)
    dot = jnp.einsum("tmc,thc->tmh", kg3, v3,
                     preferred_element_type=jnp.float32)                  # [T, M, H]

    return (loc + dot + b2.reshape(1, 1, H)).astype(out_dtype)


def _sum_body_fused_gather(idx_ref, ploc_ref, q_ref, key_ref,
                           w1_ref, b1_ref, w2_ref, b2_ref, a_ref, o_ref):
    cd = w1_ref.dtype
    tn, m = idx_ref.shape[1], idx_ref.shape[2]
    # In-kernel neighborhood gather: the key table is small per batch and its block
    # index is constant along the tile axis, so Pallas fetches it once per batch.
    # This removes the HBM write + re-read of the gathered [B,N,M,C] tensor entirely.
    keys = key_ref[0].astype(jnp.float32)             # gather on 32-bit rows
    idx = idx_ref[0].reshape(tn * m)
    kg = jnp.take(keys, idx, axis=0, mode="clip")     # [TN*M, C]
    kg3 = kg.reshape(tn, m, -1).astype(cd)
    o_ref[0] = _tile_compute(ploc_ref[0], q_ref[0], kg3,
                             w1_ref[...], b1_ref[...], w2_ref[...], b2_ref[...],
                             a_ref[...], o_ref.dtype)


def _sum_body_pregathered(ploc_ref, q_ref, kg_ref,
                          w1_ref, b1_ref, w2_ref, b2_ref, a_ref, o_ref):
    o_ref[0] = _tile_compute(ploc_ref[0], q_ref[0], kg_ref[0],
                             w1_ref[...], b1_ref[...], w2_ref[...], b2_ref[...],
                             a_ref[...], o_ref.dtype)


# --------------------------------------------------------------------------------------
# Wrapper
# --------------------------------------------------------------------------------------
def sum_kernel(pairwise_locations, mask, query_features, key_features, nbhd_idx,
               params, n_heads, *, compute_dtype=jnp.float32, row_tile_n=None,
               gather_in_kernel=True):
    # TODO(synk): mask is only consumed by MaskBatchNormNd inside the reference
    # MultiheadWeightNet (location kernel); BatchNorm is omitted here, so mask is unused.
    del mask
    B, N, M, D = pairwise_locations.shape
    C = query_features.shape[-1]
    M_total = key_features.shape[1]
    H = n_heads
    dk = params["wq"].shape[-1]
    HID = params["w1"].shape[-1]
    cd = jnp.dtype(compute_dtype)

    # ---- constant weight transforms (done once in the wrapper) ----------------------
    w1s = jnp.transpose(params["w1"], (1, 0, 2)).reshape(D, H * HID).astype(cd)
    b1s = params["b1"].reshape(1, H * HID).astype(jnp.float32)
    # Fold the [HID,1] second MLP layer and the per-head grouped reduce into a single
    # block-diagonal [H*HID, H] matrix -> one MXU matmul in the kernel.
    w2sel = (params["w2"][..., 0][:, :, None]
             * jnp.eye(H, dtype=jnp.float32)[:, None, :]).reshape(H * HID, H)
    w2sel = w2sel.astype(jnp.float32)
    b2s = params["b2"].reshape(1, H).astype(jnp.float32)
    a = jnp.einsum("hck,hdk->hcd", params["wq"], params["wk"]) / math.sqrt(dk)
    a_s = jnp.transpose(a, (1, 0, 2)).reshape(C, H * C).astype(cd)

    # Streamed inputs in the matmul dtype end-to-end (bf16 halves their HBM bytes);
    # pairwise locations pre-flattened so the kernel consumes rows with no reshape.
    ploc_flat = pairwise_locations.reshape(B, N * M, D).astype(cd)
    q = query_features.astype(cd)

    vmem_limit = _vmem_limit_bytes()
    TN = row_tile_n if row_tile_n is not None else _choose_row_tile(
        B, N, M, D, C, H, HID, M_total, cd, vmem_limit, gather_in_kernel)
    assert N % TN == 0 and (TN % 8 == 0 or TN == N), (TN, N)
    grid = (B, N // TN)

    weight_specs = [
        pl.BlockSpec((D, H * HID), lambda b, t: (0, 0)),        # W1 (head-stacked)
        pl.BlockSpec((1, H * HID), lambda b, t: (0, 0)),        # b1
        pl.BlockSpec((H * HID, H), lambda b, t: (0, 0)),        # W2 * head-select
        pl.BlockSpec((1, H), lambda b, t: (0, 0)),              # b2
        pl.BlockSpec((C, H * C), lambda b, t: (0, 0)),          # Wq Wk^T / sqrt(dk)
    ]
    weights = (w1s, b1s, w2sel, b2s, a_s)
    cparams = pltpu.CompilerParams(
        dimension_semantics=("parallel", "parallel"),   # megacore / 2-TC friendly
        vmem_limit_bytes=vmem_limit)
    out_shape = jax.ShapeDtypeStruct((B, N, M, H), jnp.float32)
    out_spec = pl.BlockSpec((1, TN, M, H), lambda b, t: (b, t, 0, 0))

    if gather_in_kernel:
        keys = key_features.astype(cd)
        idx = nbhd_idx.astype(jnp.int32)
        return pl.pallas_call(
            _sum_body_fused_gather,
            out_shape=out_shape,
            grid=grid,
            in_specs=[
                pl.BlockSpec((1, TN, M), lambda b, t: (b, t, 0)),        # nbhd_idx
                pl.BlockSpec((1, TN * M, D), lambda b, t: (b, t, 0)),    # pairwise locs
                pl.BlockSpec((1, TN, C), lambda b, t: (b, t, 0)),        # query feats
                pl.BlockSpec((1, M_total, C), lambda b, t: (b, 0, 0)),   # key table/batch
            ] + weight_specs,
            out_specs=out_spec,
            compiler_params=cparams,
        )(idx, ploc_flat, q, keys, *weights)

    # Fallback: gather outside the kernel (one fused XLA gather) and stream the gathered
    # tensor. Costs an extra HBM round trip of the largest tensor vs. the fused path.
    key_nbhd = jnp.take_along_axis(key_features[:, None, :, :],
                                   nbhd_idx[..., None], axis=2).astype(cd)
    return pl.pallas_call(
        _sum_body_pregathered,
        out_shape=out_shape,
        grid=grid,
        in_specs=[
            pl.BlockSpec((1, TN * M, D), lambda b, t: (b, t, 0)),
            pl.BlockSpec((1, TN, C), lambda b, t: (b, t, 0)),
            pl.BlockSpec((1, TN, M, C), lambda b, t: (b, t, 0, 0)),
        ] + weight_specs,
        out_specs=out_spec,
        compiler_params=cparams,
    )(ploc_flat, q, key_nbhd, *weights)


# --------------------------------------------------------------------------------------
# Pure-JAX reference (original per-head, unfolded semantics)
# --------------------------------------------------------------------------------------
def sum_kernel_ref(pairwise_locations, mask, query_features, key_features, nbhd_idx,
                   params, n_heads):
    del mask
    dk = params["wq"].shape[-1]
    key_nbhd = jnp.take_along_axis(key_features[:, None, :, :],
                                   nbhd_idx[..., None], axis=2)
    h1 = jnp.einsum("bnmd,hde->bnmhe", pairwise_locations, params["w1"]) + params["b1"]
    h1 = h1 * jax.nn.sigmoid(h1)
    loc = (jnp.einsum("bnmhe,heo->bnmho", h1, params["w2"]) + params["b2"])[..., 0]
    qh = jnp.einsum("bnc,hck->bnhk", query_features, params["wq"])
    kh = jnp.einsum("bnmc,hck->bnmhk", key_nbhd, params["wk"])
    dot = jnp.sum(qh[:, :, None, :, :] * kh, axis=-1) / math.sqrt(dk)
    return loc + dot


if __name__ == "__main__":
    B, N, M, M_total = 2, 8, 8, 16
    D_loc, C, H, HID = 8, 32, 4, 32
    DK = C // H

    key = jax.random.PRNGKey(0)
    k = jax.random.split(key, 12)

    pairwise_locations = jax.random.normal(k[0], (B, N, M, D_loc), jnp.float32)
    mask = (jax.random.uniform(k[1], (B, N, M)) > 0.2).astype(jnp.float32)
    query_features = jax.random.normal(k[2], (B, N, C), jnp.float32)
    key_features = jax.random.normal(k[3], (B, M_total, C), jnp.float32)
    nbhd_idx = jax.random.randint(k[4], (B, N, M), 0, M_total, jnp.int32)

    params = {
        "w1": 0.2 * jax.random.normal(k[5], (H, D_loc, HID), jnp.float32),
        "b1": 0.1 * jax.random.normal(k[6], (H, HID), jnp.float32),
        "w2": 0.2 * jax.random.normal(k[7], (H, HID, 1), jnp.float32),
        "b2": 0.1 * jax.random.normal(k[8], (H, 1), jnp.float32),
        "wq": 0.2 * jax.random.normal(k[9], (H, C, DK), jnp.float32),
        "wk": 0.2 * jax.random.normal(k[10], (H, C, DK), jnp.float32),
    }

    ref = sum_kernel_ref(pairwise_locations, mask, query_features, key_features,
                         nbhd_idx, params, H)

    def run(dtype, fused):
        o = sum_kernel(pairwise_locations, mask, query_features, key_features,
                       nbhd_idx, params, H, compute_dtype=dtype,
                       gather_in_kernel=fused)
        return jax.block_until_ready(o)

    # Prefer the fused in-kernel neighborhood gather (saves a full HBM round trip of the
    # gathered key tensor); fall back to an XLA-side gather if this jax/libtpu cannot
    # lower jnp.take inside Mosaic.
    use_fused_gather = True
    try:
        out = run(jnp.float32, True)
        assert out.shape == (B, N, M, H)
        assert jnp.allclose(out, ref, atol=1e-3, rtol=1e-3)
    except Exception:
        use_fused_gather = False
        out = run(jnp.float32, False)

    assert out.shape == (B, N, M, H)
    assert jnp.allclose(out, ref, atol=1e-3, rtol=1e-3), \
        f"f32 max err {jnp.max(jnp.abs(out - ref))}"

    # bf16 matmul-input / f32-accumulate path (HBM-bandwidth + MXU win on v6e/v7x).
    out_bf16 = run(jnp.bfloat16, use_fused_gather)
    assert jnp.allclose(out_bf16, ref, atol=1e-1, rtol=1e-1), \
        f"bf16 max err {jnp.max(jnp.abs(out_bf16 - ref))}"

    print("KERNEL_OK")
</pallas_src>

<mosaic_0001>
module attributes {stable_mosaic.version = 11 : i64} {
  func.func @_sum_body_pregathered(%arg0: i32, %arg1: i32, %arg2: memref<1x64x8xf32, #tpu.memory_space<vmem>>, %arg3: memref<1x8x32xf32, #tpu.memory_space<vmem>>, %arg4: memref<1x8x8x32xf32, #tpu.memory_space<vmem>>, %arg5: memref<8x128xf32, #tpu.memory_space<vmem>>, %arg6: memref<1x128xf32, #tpu.memory_space<vmem>>, %arg7: memref<128x4xf32, #tpu.memory_space<vmem>>, %arg8: memref<1x4xf32, #tpu.memory_space<vmem>>, %arg9: memref<32x128xf32, #tpu.memory_space<vmem>>, %arg10: memref<1x8x8x4xf32, #tpu.memory_space<vmem>>) attributes {dimension_semantics = [#tpu.dimension_semantics<parallel>, #tpu.dimension_semantics<parallel>], iteration_bounds = array<i64: 2, 1>, scalar_prefetch = 0 : i64, scratch_operands = 0 : i64, tpu.core_type = #tpu.core_type<tc>, window_params = [{transform_indices = @transform_0, window_bounds = array<i64: 1, 64, 8>}, {transform_indices = @transform_1, window_bounds = array<i64: 1, 8, 32>}, {transform_indices = @transform_2, window_bounds = array<i64: 1, 8, 8, 32>}, {pipeline_mode = #tpu.pipeline_mode<synchronous>, transform_indices = @transform_3, window_bounds = array<i64: 8, 128>}, {pipeline_mode = #tpu.pipeline_mode<synchronous>, transform_indices = @transform_4, window_bounds = array<i64: 1, 128>}, {pipeline_mode = #tpu.pipeline_mode<synchronous>, transform_indices = @transform_5, window_bounds = array<i64: 128, 4>}, {pipeline_mode = #tpu.pipeline_mode<synchronous>, transform_indices = @transform_6, window_bounds = array<i64: 1, 4>}, {pipeline_mode = #tpu.pipeline_mode<synchronous>, transform_indices = @transform_7, window_bounds = array<i64: 32, 128>}, {transform_indices = @transform_8, window_bounds = array<i64: 1, 8, 8, 4>}]} {
    %c0 = arith.constant 0 : index
    %c0_0 = arith.constant 0 : index
    %c0_1 = arith.constant 0 : index
    %0 = vector.load %arg2[%c0, %c0_0, %c0_1] : memref<1x64x8xf32, #tpu.memory_space<vmem>>, vector<1x64x8xf32>
    %1 = vector.shape_cast %0 : vector<1x64x8xf32> to vector<64x8xf32>
    %c0_2 = arith.constant 0 : index
    %c0_3 = arith.constant 0 : index
    %c0_4 = arith.constant 0 : index
    %2 = vector.load %arg3[%c0_2, %c0_3, %c0_4] : memref<1x8x32xf32, #tpu.memory_space<vmem>>, vector<1x8x32xf32>
    %3 = vector.shape_cast %2 : vector<1x8x32xf32> to vector<8x32xf32>
    %c0_5 = arith.constant 0 : index
    %c0_6 = arith.constant 0 : index
    %c0_7 = arith.constant 0 : index
    %c0_8 = arith.constant 0 : index
    %4 = vector.load %arg4[%c0_5, %c0_6, %c0_7, %c0_8] : memref<1x8x8x32xf32, #tpu.memory_space<vmem>>, vector<1x8x8x32xf32>
    %5 = vector.shape_cast %4 : vector<1x8x8x32xf32> to vector<8x8x32xf32>
    %c0_9 = arith.constant 0 : index
    %c0_10 = arith.constant 0 : index
    %6 = vector.load %arg5[%c0_9, %c0_10] : memref<8x128xf32, #tpu.memory_space<vmem>>, vector<8x128xf32>
    %c0_11 = arith.constant 0 : index
    %c0_12 = arith.constant 0 : index
    %7 = vector.load %arg6[%c0_11, %c0_12] : memref<1x128xf32, #tpu.memory_space<vmem>>, vector<1x128xf32>
    %c0_13 = arith.constant 0 : index
    %c0_14 = arith.constant 0 : index
    %8 = vector.load %arg7[%c0_13, %c0_14] : memref<128x4xf32, #tpu.memory_space<vmem>>, vector<128x4xf32>
    %c0_15 = arith.constant 0 : index
    %c0_16 = arith.constant 0 : index
    %9 = vector.load %arg8[%c0_15, %c0_16] : memref<1x4xf32, #tpu.memory_space<vmem>>, vector<1x4xf32>
    %c0_17 = arith.constant 0 : index
    %c0_18 = arith.constant 0 : index
    %10 = vector.load %arg9[%c0_17, %c0_18] : memref<32x128xf32, #tpu.memory_space<vmem>>, vector<32x128xf32>
    %cst = arith.constant dense<0.000000e+00> : vector<64x128xf32>
    %11 = tpu.matmul %1, %6, %cst {dimension_numbers = #tpu.dot_dimension_numbers<[1], [0], [0], [1], [0, 0, 1, 1], [], []>} : vector<64x8xf32>, vector<8x128xf32>, vector<64x128xf32> -> vector<64x128xf32>
    %12 = vector.broadcast %7 : vector<1x128xf32> to vector<64x128xf32>
    %13 = arith.addf %11, %12 : vector<64x128xf32>
    %14 = arith.negf %13 : vector<64x128xf32>
    %15 = math.exp %14 : vector<64x128xf32>
    %cst_19 = arith.constant 1.000000e+00 : f32
    %16 = vector.broadcast %cst_19 : f32 to vector<64x128xf32>
    %17 = arith.addf %16, %15 : vector<64x128xf32>
    %18 = arith.divf %16, %17 : vector<64x128xf32>
    %19 = arith.mulf %13, %18 : vector<64x128xf32>
    %cst_20 = arith.constant dense<0.000000e+00> : vector<64x4xf32>
    %20 = tpu.matmul %19, %8, %cst_20 {dimension_numbers = #tpu.dot_dimension_numbers<[1], [0], [0], [1], [0, 0, 1, 1], [], []>} : vector<64x128xf32>, vector<128x4xf32>, vector<64x4xf32> -> vector<64x4xf32>
    %21 = vector.shape_cast %20 : vector<64x4xf32> to vector<8x8x4xf32>
    %cst_21 = arith.constant dense<0.000000e+00> : vector<8x128xf32>
    %22 = tpu.matmul %3, %10, %cst_21 {dimension_numbers = #tpu.dot_dimension_numbers<[1], [0], [0], [1], [0, 0, 1, 1], [], []>} : vector<8x32xf32>, vector<32x128xf32>, vector<8x128xf32> -> vector<8x128xf32>
    %23 = vector.shape_cast %22 : vector<8x128xf32> to vector<8x4x32xf32>
    "tpu.trace_start"() <{level = 10 : i32, message = "tmc,thc->tmh"}> : () -> ()
    %cst_22 = arith.constant dense<0.000000e+00> : vector<8x8x4xf32>
    %24 = tpu.matmul %5, %23, %cst_22 {dimension_numbers = #tpu.dot_dimension_numbers<[2], [2], [1], [1], [0, 0, 0, 1, 1, 1], [0], [0]>} : vector<8x8x32xf32>, vector<8x4x32xf32>, vector<8x8x4xf32> -> vector<8x8x4xf32>
    "tpu.trace_stop"() : () -> ()
    %25 = arith.addf %21, %24 : vector<8x8x4xf32>
    %26 = vector.shape_cast %9 : vector<1x4xf32> to vector<1x1x4xf32>
    %27 = vector.broadcast %26 : vector<1x1x4xf32> to vector<8x8x4xf32>
    %28 = arith.addf %25, %27 : vector<8x8x4xf32>
    %c0_23 = arith.constant 0 : index
    %c0_24 = arith.constant 0 : index
    %c0_25 = arith.constant 0 : index
    %c0_26 = arith.constant 0 : index
    %29 = vector.load %arg10[%c0_23, %c0_24, %c0_25, %c0_26] : memref<1x8x8x4xf32, #tpu.memory_space<vmem>>, vector<1x8x8x4xf32>
    %30 = vector.shape_cast %29 : vector<1x8x8x4xf32> to vector<8x8x4xf32>
    %31 = vector.shape_cast %28 : vector<8x8x4xf32> to vector<1x8x8x4xf32>
    tpu.vector_store %arg10[%c0_23, %c0_24, %c0_25, %c0_26], %31 {strides = array<i32>} : memref<1x8x8x4xf32, #tpu.memory_space<vmem>>, vector<1x8x8x4xf32>,
    return
  }
  func.func @transform_0(%arg0: i32, %arg1: i32) -> (i32, i32, i32) {
    %c0_i32 = arith.constant 0 : i32
    %c0_i32_0 = arith.constant 0 : i32
    return %arg0, %arg1, %c0_i32 : i32, i32, i32
  }
  func.func @transform_1(%arg0: i32, %arg1: i32) -> (i32, i32, i32) {
    %c0_i32 = arith.constant 0 : i32
    %c0_i32_0 = arith.constant 0 : i32
    return %arg0, %arg1, %c0_i32 : i32, i32, i32
  }
  func.func @transform_2(%arg0: i32, %arg1: i32) -> (i32, i32, i32, i32) {
    %c0_i32 = arith.constant 0 : i32
    %c0_i32_0 = arith.constant 0 : i32
    %c0_i32_1 = arith.constant 0 : i32
    return %arg0, %arg1, %c0_i32, %c0_i32_0 : i32, i32, i32, i32
  }
  func.func @transform_3(%arg0: i32, %arg1: i32) -> (i32, i32) {
    %c0_i32 = arith.constant 0 : i32
    %c0_i32_0 = arith.constant 0 : i32
    %c0_i32_1 = arith.constant 0 : i32
    return %c0_i32, %c0_i32_0 : i32, i32
  }
  func.func @transform_4(%arg0: i32, %arg1: i32) -> (i32, i32) {
    %c0_i32 = arith.constant 0 : i32
    %c0_i32_0 = arith.constant 0 : i32
    %c0_i32_1 = arith.constant 0 : i32
    return %c0_i32, %c0_i32_0 : i32, i32
  }
  func.func @transform_5(%arg0: i32, %arg1: i32) -> (i32, i32) {
    %c0_i32 = arith.constant 0 : i32
    %c0_i32_0 = arith.constant 0 : i32
    %c0_i32_1 = arith.constant 0 : i32
    return %c0_i32, %c0_i32_0 : i32, i32
  }
  func.func @transform_6(%arg0: i32, %arg1: i32) -> (i32, i32) {
    %c0_i32 = arith.constant 0 : i32
    %c0_i32_0 = arith.constant 0 : i32
    %c0_i32_1 = arith.constant 0 : i32
    return %c0_i32, %c0_i32_0 : i32, i32
  }
  func.func @transform_7(%arg0: i32, %arg1: i32) -> (i32, i32) {
    %c0_i32 = arith.constant 0 : i32
    %c0_i32_0 = arith.constant 0 : i32
    %c0_i32_1 = arith.constant 0 : i32
    return %c0_i32, %c0_i32_0 : i32, i32
  }
  func.func @transform_8(%arg0: i32, %arg1: i32) -> (i32, i32, i32, i32) {
    %c0_i32 = arith.constant 0 : i32
    %c0_i32_0 = arith.constant 0 : i32
    %c0_i32_1 = arith.constant 0 : i32
    return %arg0, %arg1, %c0_i32, %c0_i32_0 : i32, i32, i32, i32
  }
}

</mosaic_0001>

<llo_original>
// kernel: tpu_custom_call.1
$region0: #{tpu_custom_call.1}
  #allocation0 [shape = 'u32[]', space=smem, size = 0x4, offset = 0x4, fixed_abs, tag = 'smem constant byte address 0x4 - core index']
  #allocation1 [shape = 'u32[72,128]{1,0:T(1,128)}', space=vmem, size = 0x9000, scoped, tag = 'internal scratch']
  %s0 = inlined_call_operand.vmem [shape: f32[2,64,8], index: 0, kind: input, shape index: {}]
  %s1 = inlined_call_operand.vmem [shape: f32[2,8,32], index: 1, kind: input, shape index: {}]
  %s2 = inlined_call_operand.vmem [shape: f32[2,8,8,32], index: 2, kind: input, shape index: {}]
  %s3 = inlined_call_operand.vmem [shape: f32[8,128], index: 3, kind: input, shape index: {}]
  %s4 = inlined_call_operand.vmem [shape: f32[1,128], index: 4, kind: input, shape index: {}]
  %s5 = inlined_call_operand.vmem [shape: f32[128,4], index: 5, kind: input, shape index: {}]
  %s6 = inlined_call_operand.vmem [shape: f32[1,4], index: 6, kind: input, shape index: {}]
  %s7 = inlined_call_operand.vmem [shape: f32[32,128], index: 7, kind: input, shape index: {}]
  %s8 = inlined_call_operand.vmem [shape: f32[2,8,8,4], index: 8, kind: output, shape index: {}]
  %s9 = sld [smem:[#allocation0]]
  $region65: #{tpu_custom_call.1} parent=0
    _
  %s11 = ssub.s32 1, %s9
  %s12 = scalar_select 0, %s11, %s9
  loop: start=0, step=1, limit=4
  $region2: #{tpu_custom_call.1} parent=0 // loop_pre_header
    _
  $region3: #{tpu_custom_call.1} parent=0 // loop_header
    %s14 = sphi 0, %s18
    %p15 = scmp.ge.s32.totalorder %s14, 4
    %s21 = sphi 0, %s33
    %s22 = sphi 0, %s29
    %s23 = sphi 0, %s21
    %s24 = sphi 0, %s22
    %s25 = sphi 0, %s23
    %s26 = sphi 0, %s24
    %s38 = sphi 0, %s40
    %s41 = sphi 0, %s38
    %s42 = sphi 0, %s41
    %s58 = sphi 0, %s42
    %s66 = sphi 0, %s68
    %s69 = sphi 0, %s66
    %s70 = sphi 0, %s69
    %s86 = sphi 0, %s70
    %s94 = sphi 0, %s96
    %s97 = sphi 0, %s94
    %s98 = sphi 0, %s97
    %s114 = sphi 0, %s98
    %s118 = sphi 0, %s118
    %s120 = sphi 0, %s118
    %s121 = sphi 0, %s120
    %s135 = sphi 0, %s121
    %s139 = sphi 0, %s139
    %s141 = sphi 0, %s139
    %s142 = sphi 0, %s141
    %s156 = sphi 0, %s142
    %s160 = sphi 0, %s160
    %s162 = sphi 0, %s160
    %s163 = sphi 0, %s162
    %s177 = sphi 0, %s163
    %s181 = sphi 0, %s181
    %s183 = sphi 0, %s181
    %s184 = sphi 0, %s183
    %s198 = sphi 0, %s184
    %s202 = sphi 0, %s202
    %s204 = sphi 0, %s202
    %s205 = sphi 0, %s204
    %s219 = sphi 0, %s205
    %s227 = sphi 0, %s229
    %s230 = sphi 0, %s227
    %s231 = sphi 0, %s230
    %s247 = sphi 0, %s231
  $region4: #{tpu_custom_call.1} parent=0 // loop_header_branch
    %17 = sbr.rel (%p15) target = $region8
  $region5: #{tpu_custom_call.1} parent=0 // loop_body
    %s19 = ssub.s32 %s14, 1
    %s20 = ssub.s32 %s14, 2
    %s27 = sadd.s32 1, %s22
    %p28 = scmp.ge.s32.totalorder %s27, 1
    %s29 = scalar_select %p28, 0, %s27
    %s30 = sadd.s32 1, %s21
    %s31 = scalar_select %p28, %s30, %s21
    %p32 = scmp.ge.s32.totalorder %s31, 2
    %s33 = scalar_select %p32, 0, %s31
    %s34 = ssub.s32 %s21, %s33
    %s35 = ssub.s32 %s22, %s29
    %s36 = sor.u32 %s34, %s35
    %p37 = scmp.eq.s32.totalorder %s36, 0
    %s39 = sadd.s32 %s38, 1
    %s40 = scalar_select %p37, %s38, %s39
    %p43 = pneg %p37
    %p44 = scmp.eq.s32.totalorder %s14, 1
    %p45 = por %p43, %p44
    %p46 = scmp.ne.s32.totalorder %s38, %s41
    %p47 = scmp.eq.s32.totalorder %s14, 0
    %p48 = por %p46, %p47
    %p49 = scmp.ne.s32.totalorder %s38, %s41
    %p50 = scmp.eq.s32.totalorder %s19, 1
    %p51 = por %p49, %p50
    %p52 = scmp.ne.s32.totalorder %s41, %s42
    %p53 = scmp.eq.s32.totalorder %s19, 0
    %p54 = por %p52, %p53
    %p55 = scmp.ne.s32.totalorder %s41, %s42
    %p56 = scmp.eq.s32.totalorder %s20, 1
    %p57 = por %p55, %p56
    %p59 = scmp.ne.s32.totalorder %s42, %s58
    %p60 = scmp.eq.s32.totalorder %s20, 0
    %p61 = por %p59, %p60
    %s62 = ssub.s32 %s21, %s33
    %s63 = ssub.s32 %s22, %s29
    %s64 = sor.u32 %s62, %s63
    %p65 = scmp.eq.s32.totalorder %s64, 0
    %s67 = sadd.s32 %s66, 1
    %s68 = scalar_select %p65, %s66, %s67
    %p71 = pneg %p65
    %p72 = scmp.eq.s32.totalorder %s14, 1
    %p73 = por %p71, %p72
    %p74 = scmp.ne.s32.totalorder %s66, %s69
    %p75 = scmp.eq.s32.totalorder %s14, 0
    %p76 = por %p74, %p75
    %p77 = scmp.ne.s32.totalorder %s66, %s69
    %p78 = scmp.eq.s32.totalorder %s19, 1
    %p79 = por %p77, %p78
    %p80 = scmp.ne.s32.totalorder %s69, %s70
    %p81 = scmp.eq.s32.totalorder %s19, 0
    %p82 = por %p80, %p81
    %p83 = scmp.ne.s32.totalorder %s69, %s70
    %p84 = scmp.eq.s32.totalorder %s20, 1
    %p85 = por %p83, %p84
    %p87 = scmp.ne.s32.totalorder %s70, %s86
    %p88 = scmp.eq.s32.totalorder %s20, 0
    %p89 = por %p87, %p88
    %s90 = ssub.s32 %s21, %s33
    %s91 = ssub.s32 %s22, %s29
    %s92 = sor.u32 %s90, %s91
    %p93 = scmp.eq.s32.totalorder %s92, 0
    %s95 = sadd.s32 %s94, 1
    %s96 = scalar_select %p93, %s94, %s95
    %p99 = pneg %p93
    %p100 = scmp.eq.s32.totalorder %s14, 1
    %p101 = por %p99, %p100
    %p102 = scmp.ne.s32.totalorder %s94, %s97
    %p103 = scmp.eq.s32.totalorder %s14, 0
    %p104 = por %p102, %p103
    %p105 = scmp.ne.s32.totalorder %s94, %s97
    %p106 = scmp.eq.s32.totalorder %s19, 1
    %p107 = por %p105, %p106
    %p108 = scmp.ne.s32.totalorder %s97, %s98
    %p109 = scmp.eq.s32.totalorder %s19, 0
    %p110 = por %p108, %p109
    %p111 = scmp.ne.s32.totalorder %s97, %s98
    %p112 = scmp.eq.s32.totalorder %s20, 1
    %p113 = por %p111, %p112
    %p115 = scmp.ne.s32.totalorder %s98, %s114
    %p116 = scmp.eq.s32.totalorder %s20, 0
    %p117 = por %p115, %p116
    %s119 = sadd.s32 %s118, 1
    %p122 = scmp.eq.s32.totalorder %s14, 1
    %p123 = scmp.ne.s32.totalorder %s118, %s120
    %p124 = scmp.eq.s32.totalorder %s14, 0
    %p125 = por %p123, %p124
    %p126 = scmp.ne.s32.totalorder %s118, %s120
    %p127 = scmp.eq.s32.totalorder %s19, 1
    %p128 = por %p126, %p127
    %p129 = scmp.ne.s32.totalorder %s120, %s121
    %p130 = scmp.eq.s32.totalorder %s19, 0
    %p131 = por %p129, %p130
    %p132 = scmp.ne.s32.totalorder %s120, %s121
    %p133 = scmp.eq.s32.totalorder %s20, 1
    %p134 = por %p132, %p133
    %p136 = scmp.ne.s32.totalorder %s121, %s135
    %p137 = scmp.eq.s32.totalorder %s20, 0
    %p138 = por %p136, %p137
    %s140 = sadd.s32 %s139, 1
    %p143 = scmp.eq.s32.totalorder %s14, 1
    %p144 = scmp.ne.s32.totalorder %s139, %s141
    %p145 = scmp.eq.s32.totalorder %s14, 0
    %p146 = por %p144, %p145
    %p147 = scmp.ne.s32.totalorder %s139, %s141
    %p148 = scmp.eq.s32.totalorder %s19, 1
    %p149 = por %p147, %p148
    %p150 = scmp.ne.s32.totalorder %s141, %s142
    %p151 = scmp.eq.s32.totalorder %s19, 0
    %p152 = por %p150, %p151
    %p153 = scmp.ne.s32.totalorder %s141, %s142
    %p154 = scmp.eq.s32.totalorder %s20, 1
    %p155 = por %p153, %p154
    %p157 = scmp.ne.s32.totalorder %s142, %s156
    %p158 = scmp.eq.s32.totalorder %s20, 0
    %p159 = por %p157, %p158
    %s161 = sadd.s32 %s160, 1
    %p164 = scmp.eq.s32.totalorder %s14, 1
    %p165 = scmp.ne.s32.totalorder %s160, %s162
    %p166 = scmp.eq.s32.totalorder %s14, 0
    %p167 = por %p165, %p166
    %p168 = scmp.ne.s32.totalorder %s160, %s162
    %p169 = scmp.eq.s32.totalorder %s19, 1
    %p170 = por %p168, %p169
    %p171 = scmp.ne.s32.totalorder %s162, %s163
    %p172 = scmp.eq.s32.totalorder %s19, 0
    %p173 = por %p171, %p172
    %p174 = scmp.ne.s32.totalorder %s162, %s163
    %p175 = scmp.eq.s32.totalorder %s20, 1
    %p176 = por %p174, %p175
    %p178 = scmp.ne.s32.totalorder %s163, %s177
    %p179 = scmp.eq.s32.totalorder %s20, 0
    %p180 = por %p178, %p179
    %s182 = sadd.s32 %s181, 1
    %p185 = scmp.eq.s32.totalorder %s14, 1
    %p186 = scmp.ne.s32.totalorder %s181, %s183
    %p187 = scmp.eq.s32.totalorder %s14, 0
    %p188 = por %p186, %p187
    %p189 = scmp.ne.s32.totalorder %s181, %s183
    %p190 = scmp.eq.s32.totalorder %s19, 1
    %p191 = por %p189, %p190
    %p192 = scmp.ne.s32.totalorder %s183, %s184
    %p193 = scmp.eq.s32.totalorder %s19, 0
    %p194 = por %p192, %p193
    %p195 = scmp.ne.s32.totalorder %s183, %s184
    %p196 = scmp.eq.s32.totalorder %s20, 1
    %p197 = por %p195, %p196
    %p199 = scmp.ne.s32.totalorder %s184, %s198
    %p200 = scmp.eq.s32.totalorder %s20, 0
    %p201 = por %p199, %p200
    %s203 = sadd.s32 %s202, 1
    %p206 = scmp.eq.s32.totalorder %s14, 1
    %p207 = scmp.ne.s32.totalorder %s202, %s204
    %p208 = scmp.eq.s32.totalorder %s14, 0
    %p209 = por %p207, %p208
    %p210 = scmp.ne.s32.totalorder %s202, %s204
    %p211 = scmp.eq.s32.totalorder %s19, 1
    %p212 = por %p210, %p211
    %p213 = scmp.ne.s32.totalorder %s204, %s205
    %p214 = scmp.eq.s32.totalorder %s19, 0
    %p215 = por %p213, %p214
    %p216 = scmp.ne.s32.totalorder %s204, %s205
    %p217 = scmp.eq.s32.totalorder %s20, 1
    %p218 = por %p216, %p217
    %p220 = scmp.ne.s32.totalorder %s205, %s219
    %p221 = scmp.eq.s32.totalorder %s20, 0
    %p222 = por %p220, %p221
    %s223 = ssub.s32 %s21, %s33
    %s224 = ssub.s32 %s22, %s29
    %s225 = sor.u32 %s223, %s224
    %p226 = scmp.eq.s32.totalorder %s225, 0
    %s228 = sadd.s32 %s227, 1
    %s229 = scalar_select %p226, %s227, %s228
    %p232 = pneg %p226
    %p233 = scmp.eq.s32.totalorder %s14, 1
    %p234 = por %p232, %p233
    %p235 = scmp.ne.s32.totalorder %s227, %s230
    %p236 = scmp.eq.s32.totalorder %s14, 0
    %p237 = por %p235, %p236
    %p238 = scmp.ne.s32.totalorder %s227, %s230
    %p239 = scmp.eq.s32.totalorder %s19, 1
    %p240 = por %p238, %p239
    %p241 = scmp.ne.s32.totalorder %s230, %s231
    %p242 = scmp.eq.s32.totalorder %s19, 0
    %p243 = por %p241, %p242
    %p244 = scmp.ne.s32.totalorder %s230, %s231
    %p245 = scmp.eq.s32.totalorder %s20, 1
    %p246 = por %p244, %p245
    %p248 = scmp.ne.s32.totalorder %s231, %s247
    %p249 = scmp.eq.s32.totalorder %s20, 0
    %p250 = por %p248, %p249
    %p251 = scmp.le.s32.totalorder 1, %s14
    %p252 = scmp.lt.s32.totalorder %s14, 3
    %p253 = pnand %p251, %p252
    %p254 = pneg %p253
    // Predicated region
    $region9: #{tpu_custom_call.1} parent=5 // pred_check
      _
    $region10: #{tpu_custom_call.1} parent=5 // pred_check_branch
      %256 = sbr.rel (%p253) target = $region12
    $region11: #{tpu_custom_call.1} parent=5 // pred_region
      %s257 = ssub.s32 %s14, 1
      // Predicated region
      $region13: #{tpu_custom_call.1} parent=11 // pred_check
        %p258 = pneg %p131
      $region14: #{tpu_custom_call.1} parent=11 // pred_check_branch
        %260 = sbr.rel (%p258) target = $region16
      $region15: #{tpu_custom_call.1} parent=11 // pred_region
        _
      $region16: #{tpu_custom_call.1} parent=11 // pred_fallthru
        _
      // Predicated region
      $region17: #{tpu_custom_call.1} parent=11 // pred_check
        %p261 = pneg %p152
      $region18: #{tpu_custom_call.1} parent=11 // pred_check_branch
        %263 = sbr.rel (%p261) target = $region20
      $region19: #{tpu_custom_call.1} parent=11 // pred_region
        _
      $region20: #{tpu_custom_call.1} parent=11 // pred_fallthru
        _
      // Predicated region
      $region21: #{tpu_custom_call.1} parent=11 // pred_check
        %p264 = pneg %p173
      $region22: #{tpu_custom_call.1} parent=11 // pred_check_branch
        %266 = sbr.rel (%p264) target = $region24
      $region23: #{tpu_custom_call.1} parent=11 // pred_region
        _
      $region24: #{tpu_custom_call.1} parent=11 // pred_fallthru
        _
      // Predicated region
      $region25: #{tpu_custom_call.1} parent=11 // pred_check
        %p267 = pneg %p194
      $region26: #{tpu_custom_call.1} parent=11 // pred_check_branch
        %269 = sbr.rel (%p267) target = $region28
      $region27: #{tpu_custom_call.1} parent=11 // pred_region
        _
      $region28: #{tpu_custom_call.1} parent=11 // pred_fallthru
        _
      // Predicated region
      $region29: #{tpu_custom_call.1} parent=11 // pred_check
        %p270 = pneg %p215
      $region30: #{tpu_custom_call.1} parent=11 // pred_check_branch
        %272 = sbr.rel (%p270) target = $region32
      $region31: #{tpu_custom_call.1} parent=11 // pred_region
        _
      $region32: #{tpu_custom_call.1} parent=11 // pred_fallthru
        _
    $region12: #{tpu_custom_call.1} parent=5 // pred_fallthru
      _
    %p273 = scmp.lt.s32.totalorder %s14, 2
    // Predicated region
    $region33: #{tpu_custom_call.1} parent=5 // pred_check
      %p274 = pneg %p273
    $region34: #{tpu_custom_call.1} parent=5 // pred_check_branch
      %276 = sbr.rel (%p274) target = $region36
    $region35: #{tpu_custom_call.1} parent=5 // pred_region
      // Predicated region
      $region37: #{tpu_custom_call.1} parent=35 // pred_check
        %p277 = pneg %p48
      $region38: #{tpu_custom_call.1} parent=35 // pred_check_branch
        %279 = sbr.rel (%p277) target = $region40
      $region39: #{tpu_custom_call.1} parent=35 // pred_region
        %s280 = smul.u32 8, %s22
        %p281 = scmp.lt.s32.totalorder %s21, 1
        %s282 = scalar_select %p281, %s21, 1
        %p283 = scmp.lt.s32.totalorder %s280, 7
        %s284 = scalar_select %p283, %s280, 7
        %s285 = smul.addr %s282, 8
        %s286 = sadd.s32 %s284, %s285
        %s287 = smul.addr %s286, 8
        %s288 = scalar_lea.vmem %s0, %s287
        %s289 = smul.u32 8, %s22
      $region40: #{tpu_custom_call.1} parent=35 // pred_fallthru
        _
      // Predicated region
      $region41: #{tpu_custom_call.1} parent=35 // pred_check
        %p290 = pneg %p76
      $region42: #{tpu_custom_call.1} parent=35 // pred_check_branch
        %292 = sbr.rel (%p290) target = $region44
      $region43: #{tpu_custom_call.1} parent=35 // pred_region
        %p293 = scmp.lt.s32.totalorder %s21, 1
        %s294 = scalar_select %p293, %s21, 1
        %p295 = scmp.lt.s32.totalorder %s22, 0
        %s296 = scalar_select %p295, %s22, 0
        %s297 = sadd.s32 %s296, %s294
        %s298 = smul.addr %s297, 8
        %s299 = scalar_lea.vmem %s1, %s298
      $region44: #{tpu_custom_call.1} parent=35 // pred_fallthru
        _
      // Predicated region
      $region45: #{tpu_custom_call.1} parent=35 // pred_check
        %p300 = pneg %p104
      $region46: #{tpu_custom_call.1} parent=35 // pred_check_branch
        %302 = sbr.rel (%p300) target = $region48
      $region47: #{tpu_custom_call.1} parent=35 // pred_region
        %s303 = smul.u32 8, %s22
        %p304 = scmp.lt.s32.totalorder %s21, 1
        %s305 = scalar_select %p304, %s21, 1
        %p306 = scmp.lt.s32.totalorder %s303, 7
        %s307 = scalar_select %p306, %s303, 7
        %s308 = smul.addr %s305, 8
        %s309 = sadd.s32 %s307, %s308
        %s310 = smul.addr %s309, 8
        %s311 = scalar_lea.vmem %s2, %s310
        %s312 = smul.u32 8, %s22
      $region48: #{tpu_custom_call.1} parent=35 // pred_fallthru
        _
    $region36: #{tpu_custom_call.1} parent=5 // pred_fallthru
      _
    %p313 = scmp.le.s32.totalorder 1, %s14
    %p314 = scmp.lt.s32.totalorder %s14, 3
    %p315 = pnand %p313, %p314
    %p316 = pneg %p315
    // Predicated region
    $region49: #{tpu_custom_call.1} parent=5 // pred_check
      _
    $region50: #{tpu_custom_call.1} parent=5 // pred_check_branch
      %318 = sbr.rel (%p315) target = $region52
    $region51: #{tpu_custom_call.1} parent=5 // pred_region
      %s319 = ssub.s32 %s14, 1
      %s320 = smul.u32 8, %s24
      %p321 = scmp.lt.s32.totalorder %s23, 1
      %s322 = scalar_select %p321, %s23, 1
      %p323 = scmp.lt.s32.totalorder %s320, 7
      %s324 = scalar_select %p323, %s320, 7
      %s325 = smul.addr %s322, 8
      %s326 = sadd.s32 %s324, %s325
      %s327 = smul.addr %s326, 8
      %s328 = scalar_lea.vmem %s0, %s327
      %p329 = pneg %p54
      %p330 = pneg %p51
      %p331 = scmp.lt.s32.totalorder %s23, 1
      %s332 = scalar_select %p331, %s23, 1
      %p333 = scmp.lt.s32.totalorder %s24, 0
      %s334 = scalar_select %p333, %s24, 0
      %s335 = sadd.s32 %s334, %s332
      %s336 = smul.addr %s335, 8
      %s337 = scalar_lea.vmem %s1, %s336
      %p338 = pneg %p82
      %p339 = pneg %p79
      %s340 = smul.u32 8, %s24
      %p341 = scmp.lt.s32.totalorder %s23, 1
      %s342 = scalar_select %p341, %s23, 1
      %p343 = scmp.lt.s32.totalorder %s340, 7
      %s344 = scalar_select %p343, %s340, 7
      %s345 = smul.addr %s342, 8
      %s346 = sadd.s32 %s344, %s345
      %s347 = smul.addr %s346, 8
      %s348 = scalar_lea.vmem %s2, %s347
      %p349 = pneg %p110
      %p350 = pneg %p107
      %p351 = pneg %p131
      %p352 = pneg %p128
      %p353 = pneg %p152
      %p354 = pneg %p149
      %p355 = pneg %p173
      %p356 = pneg %p170
      %p357 = pneg %p194
      %p358 = pneg %p191
      %p359 = pneg %p215
      %p360 = pneg %p212
      %p361 = pneg %p243
      %p362 = pneg %p240
      %s363 = smul.u32 8, %s24
      %p364 = scmp.lt.s32.totalorder %s23, 1
      %s365 = scalar_select %p364, %s23, 1
      %p366 = scmp.lt.s32.totalorder %s363, 7
      %s367 = scalar_select %p366, %s363, 7
      %s368 = smul.addr %s365, 8
      %s369 = sadd.s32 %s367, %s368
      %s370 = smul.addr %s369, 8
      %s371 = scalar_lea.vmem %s8, %s370
      %s372 = smul.u32 8, %s24
      %p373 = scmp.lt.s32.totalorder %s23, 1
      %s374 = scalar_select %p373, %s23, 1
      %p375 = scmp.lt.s32.totalorder %s372, 7
      %s376 = scalar_select %p375, %s372, 7
      %s377 = smul.addr %s374, 8
      %s378 = sadd.s32 %s376, %s377
      %s379 = smul.addr %s378, 8
      %s380 = scalar_lea.vmem %s0, %s379
      %s381 = smul.u32 8, %s24
      %p382 = scmp.lt.s32.totalorder %s23, 1
      %s383 = scalar_select %p382, %s23, 1
      %p384 = scmp.lt.s32.totalorder %s24, 0
      %s385 = scalar_select %p384, %s24, 0
      %s386 = sadd.s32 %s385, %s383
      %s387 = smul.addr %s386, 8
      %s388 = scalar_lea.vmem %s1, %s387
      %s389 = smul.u32 8, %s24
      %p390 = scmp.lt.s32.totalorder %s23, 1
      %s391 = scalar_select %p390, %s23, 1
      %p392 = scmp.lt.s32.totalorder %s389, 7
      %s393 = scalar_select %p392, %s389, 7
      %s394 = smul.addr %s391, 8
      %s395 = sadd.s32 %s393, %s394
      %s396 = smul.addr %s395, 8
      %s397 = scalar_lea.vmem %s2, %s396
      %s398 = smul.u32 8, %s24
      %s399 = smul.u32 8, %s24
      %p400 = scmp.lt.s32.totalorder %s23, 1
      %s401 = scalar_select %p400, %s23, 1
      %p402 = scmp.lt.s32.totalorder %s399, 7
      %s403 = scalar_select %p402, %s399, 7
      %s404 = smul.addr %s401, 8
      %s405 = sadd.s32 %s403, %s404
      %s406 = smul.addr %s405, 8
      %s407 = scalar_lea.vmem %s8, %s406
      %s408 = smul.u32 8, %s24
      %v409 = vld [vmem:[%s380] sm:$0xff]
      %v410 = vld [vmem:[%s380 + $0x8] sm:$0xff]
      %v411 = vld [vmem:[%s380 + $0x10] sm:$0xff]
      %v412 = vld [vmem:[%s380 + $0x18] sm:$0xff]
      %v413 = vld [vmem:[%s380 + $0x20] sm:$0xff]
      %v414 = vld [vmem:[%s380 + $0x28] sm:$0xff]
      %v415 = vld [vmem:[%s380 + $0x30] sm:$0xff]
      %v416 = vld [vmem:[%s380 + $0x38] sm:$0xff]
      %v417 = vld [vmem:[%s388] sm:$0xff]
      %v418 = vld [vmem:[%s397] sm:$0xff]
      %v419 = vld [vmem:[%s397 + $0x8] sm:$0xff]
      %v420 = vld [vmem:[%s397 + $0x10] sm:$0xff]
      %v421 = vld [vmem:[%s397 + $0x18] sm:$0xff]
      %v422 = vld [vmem:[%s397 + $0x20] sm:$0xff]
      %v423 = vld [vmem:[%s397 + $0x28] sm:$0xff]
      %v424 = vld [vmem:[%s397 + $0x30] sm:$0xff]
      %v425 = vld [vmem:[%s397 + $0x38] sm:$0xff]
      %v426 = vld [vmem:[%s3] sm:$0xff]
      %v427 = vld [vmem:[%s4] sm:$0x1]
      %v428 = vld [vmem:[%s5] sm:$0xff]
      %v429 = vld [vmem:[%s5 + $0x8] sm:$0xff]
      %v430 = vld [vmem:[%s5 + $0x10] sm:$0xff]
      %v431 = vld [vmem:[%s5 + $0x18] sm:$0xff]
      %v432 = vld [vmem:[%s5 + $0x20] sm:$0xff]
      %v433 = vld [vmem:[%s5 + $0x28] sm:$0xff]
      %v434 = vld [vmem:[%s5 + $0x30] sm:$0xff]
      %v435 = vld [vmem:[%s5 + $0x38] sm:$0xff]
      %v436 = vld [vmem:[%s5 + $0x40] sm:$0xff]
      %v437 = vld [vmem:[%s5 + $0x48] sm:$0xff]
      %v438 = vld [vmem:[%s5 + $0x50] sm:$0xff]
      %v439 = vld [vmem:[%s5 + $0x58] sm:$0xff]
      %v440 = vld [vmem:[%s5 + $0x60] sm:$0xff]
      %v441 = vld [vmem:[%s5 + $0x68] sm:$0xff]
      %v442 = vld [vmem:[%s5 + $0x70] sm:$0xff]
      %v443 = vld [vmem:[%s5 + $0x78] sm:$0xff]
      %v444 = vld [vmem:[%s6] sm:$0x1]
      %v445 = vld [vmem:[%s7] sm:$0xff]
      %v446 = vld [vmem:[%s7 + $0x8] sm:$0xff]
      %v447 = vld [vmem:[%s7 + $0x10] sm:$0xff]
      %v448 = vld [vmem:[%s7 + $0x18] sm:$0xff]
      %v450 = vperm.slane %v427, 0
      %vm452 = vcmask 64512
      %v454 = vsel %vm452, %v409, 0
      %v457 = vsel %vm452, %v410, 0
      %v460 = vsel %vm452, %v411, 0
      %v463 = vsel %vm452, %v412, 0
      %v466 = vsel %vm452, %v413, 0
      %v469 = vsel %vm452, %v414, 0
      %v472 = vsel %vm452, %v415, 0
      %v475 = vsel %vm452, %v416, 0
      %477 = vmatpush.msra.mxu0 0.0
      %478 = vmatpush.msra.mxu0 0.0
      %479 = vmatpush.msra.mxu0 0.0
      %480 = vmatpush.msra.mxu0 0.0
      %481 = vmatpush.msra.mxu0 0.0
      %482 = vmatpush.msra.mxu0 0.0
      %483 = vmatpush.msra.mxu0 0.0
      %484 = vmatpush.msra.mxu0 0.0
      %485 = vmatpush.msra.mxu0 0.0
      %486 = vmatpush.msra.mxu0 0.0
      %487 = vmatpush.msra.mxu0 0.0
      %488 = vmatpush.msra.mxu0 0.0
      %489 = vmatpush.msra.mxu0 0.0
      %490 = vmatpush.msra.mxu0 0.0
      %491 = vmatpush.msra.mxu0 0.0
      %492 = vmatpush.msra.mxu0 %v426
      %493 = vmatmul.f32.gmra.mxu0 %v454
      %v494 = vpop.f32.mrf.mxu0
      %v495 = vadd.f32 %v450, %v494
      %496 = vmatmul.f32.gmra.mxu0 %v457
      %v497 = vpop.f32.mrf.mxu0
      %v498 = vadd.f32 %v450, %v497
      %499 = vmatmul.f32.gmra.mxu0 %v460
      %v500 = vpop.f32.mrf.mxu0
      %v501 = vadd.f32 %v450, %v500
      %502 = vmatmul.f32.gmra.mxu0 %v463
      %v503 = vpop.f32.mrf.mxu0
      %v504 = vadd.f32 %v450, %v503
      %505 = vmatmul.f32.gmra.mxu0 %v466
      %v506 = vpop.f32.mrf.mxu0
      %v507 = vadd.f32 %v450, %v506
      %508 = vmatmul.f32.gmra.mxu0 %v469
      %v509 = vpop.f32.mrf.mxu0
      %v510 = vadd.f32 %v450, %v509
      %511 = vmatmul.f32.gmra.mxu0 %v472
      %v512 = vpop.f32.mrf.mxu0
      %v513 = vadd.f32 %v450, %v512
      %514 = vmatmul.f32.gmra.mxu0 %v475
      %v515 = vpop.f32.mrf.mxu0
      %v516 = vadd.f32 %v450, %v515
      %517 = vdwg.mxu0
      %v518 = vxor.u32 %v495, 2147483648
      %v519 = vxor.u32 %v498, 2147483648
      %v520 = vxor.u32 %v501, 2147483648
      %v521 = vxor.u32 %v504, 2147483648
      %v522 = vxor.u32 %v507, 2147483648
      %v523 = vxor.u32 %v510, 2147483648
      %v524 = vxor.u32 %v513, 2147483648
      %v525 = vxor.u32 %v516, 2147483648
      %v526 = vmul.f32 %v518, 1.442695
      %v527 = vpow.pop %v526
      %v528 = vmul.f32 %v519, 1.442695
      %v529 = vpow.pop %v528
      %v530 = vmul.f32 %v520, 1.442695
      %v531 = vpow.pop %v530
      %v532 = vmul.f32 %v521, 1.442695
      %v533 = vpow.pop %v532
      %v534 = vmul.f32 %v522, 1.442695
      %v535 = vpow.pop %v534
      %v536 = vmul.f32 %v523, 1.442695
      %v537 = vpow.pop %v536
      %v538 = vmul.f32 %v524, 1.442695
      %v539 = vpow.pop %v538
      %v540 = vmul.f32 %v525, 1.442695
      %v541 = vpow.pop %v540
      %v542 = vadd.f32 %v527, 1.0
      %v543 = vadd.f32 %v529, 1.0
      %v544 = vadd.f32 %v531, 1.0
      %v545 = vadd.f32 %v533, 1.0
      %v546 = vadd.f32 %v535, 1.0
      %v547 = vadd.f32 %v537, 1.0
      %v548 = vadd.f32 %v539, 1.0
      %v549 = vadd.f32 %v541, 1.0
      %v550 = vrcp.pop %v542
      %v551 = vmul.f32 %v542, %v550
      %v552 = vsub.f32 1.0, %v551
      %v553 = vmul.f32 %v550, %v552
      %v554 = vadd.f32 %v550, %v553
      %vm555 = vweird.f32 %v542
      %vm556 = vweird.f32 %v550
      %vm557 = vmor %vm555, %vm556
      %v558 = vsel %vm557, %v550, %v554
      %v559 = vand.u32 2147483647, %v542
      %vm560 = vcmp.eq.f32.partialorder %v559, 8.507059e+37
      %v561 = vand.u32 %v542, 2147483648
      %v562 = vor.u32 1.1754944e-38, %v561
      %v563 = vsel %vm560, %v562, %v558
      %v564 = vmul.f32 1.0, %v563
      %v565 = vrcp.pop %v543
      %v566 = vmul.f32 %v543, %v565
      %v567 = vsub.f32 1.0, %v566
      %v568 = vmul.f32 %v565, %v567
      %v569 = vadd.f32 %v565, %v568
      %vm570 = vweird.f32 %v543
      %vm571 = vweird.f32 %v565
      %vm572 = vmor %vm570, %vm571
      %v573 = vsel %vm572, %v565, %v569
      %v574 = vand.u32 2147483647, %v543
      %vm575 = vcmp.eq.f32.partialorder %v574, 8.507059e+37
      %v576 = vand.u32 %v543, 2147483648
      %v577 = vor.u32 1.1754944e-38, %v576
      %v578 = vsel %vm575, %v577, %v573
      %v579 = vmul.f32 1.0, %v578
      %v580 = vrcp.pop %v544
      %v581 = vmul.f32 %v544, %v580
      %v582 = vsub.f32 1.0, %v581
      %v583 = vmul.f32 %v580, %v582
      %v584 = vadd.f32 %v580, %v583
      %vm585 = vweird.f32 %v544
      %vm586 = vweird.f32 %v580
      %vm587 = vmor %vm585, %vm586
      %v588 = vsel %vm587, %v580, %v584
      %v589 = vand.u32 2147483647, %v544
      %vm590 = vcmp.eq.f32.partialorder %v589, 8.507059e+37
      %v591 = vand.u32 %v544, 2147483648
      %v592 = vor.u32 1.1754944e-38, %v591
      %v593 = vsel %vm590, %v592, %v588
      %v594 = vmul.f32 1.0, %v593
      %v595 = vrcp.pop %v545
      %v596 = vmul.f32 %v545, %v595
      %v597 = vsub.f32 1.0, %v596
      %v598 = vmul.f32 %v595, %v597
      %v599 = vadd.f32 %v595, %v598
      %vm600 = vweird.f32 %v545
      %vm601 = vweird.f32 %v595
      %vm602 = vmor %vm600, %vm601
      %v603 = vsel %vm602, %v595, %v599
      %v604 = vand.u32 2147483647, %v545
      %vm605 = vcmp.eq.f32.partialorder %v604, 8.507059e+37
      %v606 = vand.u32 %v545, 2147483648
      %v607 = vor.u32 1.1754944e-38, %v606
      %v608 = vsel %vm605, %v607, %v603
      %v609 = vmul.f32 1.0, %v608
      %v610 = vrcp.pop %v546
      %v611 = vmul.f32 %v546, %v610
      %v612 = vsub.f32 1.0, %v611
      %v613 = vmul.f32 %v610, %v612
      %v614 = vadd.f32 %v610, %v613
      %vm615 = vweird.f32 %v546
      %vm616 = vweird.f32 %v610
      %vm617 = vmor %vm615, %vm616
      %v618 = vsel %vm617, %v610, %v614
      %v619 = vand.u32 2147483647, %v546
      %vm620 = vcmp.eq.f32.partialorder %v619, 8.507059e+37
      %v621 = vand.u32 %v546, 2147483648
      %v622 = vor.u32 1.1754944e-38, %v621
      %v623 = vsel %vm620, %v622, %v618
      %v624 = vmul.f32 1.0, %v623
      %v625 = vrcp.pop %v547
      %v626 = vmul.f32 %v547, %v625
      %v627 = vsub.f32 1.0, %v626
      %v628 = vmul.f32 %v625, %v627
      %v629 = vadd.f32 %v625, %v628
      %vm630 = vweird.f32 %v547
      %vm631 = vweird.f32 %v625
      %vm632 = vmor %vm630, %vm631
      %v633 = vsel %vm632, %v625, %v629
      %v634 = vand.u32 2147483647, %v547
      %vm635 = vcmp.eq.f32.partialorder %v634, 8.507059e+37
      %v636 = vand.u32 %v547, 2147483648
      %v637 = vor.u32 1.1754944e-38, %v636
      %v638 = vsel %vm635, %v637, %v633
      %v639 = vmul.f32 1.0, %v638
      %v640 = vrcp.pop %v548
      %v641 = vmul.f32 %v548, %v640
      %v642 = vsub.f32 1.0, %v641
      %v643 = vmul.f32 %v640, %v642
      %v644 = vadd.f32 %v640, %v643
      %vm645 = vweird.f32 %v548
      %vm646 = vweird.f32 %v640
      %vm647 = vmor %vm645, %vm646
      %v648 = vsel %vm647, %v640, %v644
      %v649 = vand.u32 2147483647, %v548
      %vm650 = vcmp.eq.f32.partialorder %v649, 8.507059e+37
      %v651 = vand.u32 %v548, 2147483648
      %v652 = vor.u32 1.1754944e-38, %v651
      %v653 = vsel %vm650, %v652, %v648
      %v654 = vmul.f32 1.0, %v653
      %v655 = vrcp.pop %v549
      %v656 = vmul.f32 %v549, %v655
      %v657 = vsub.f32 1.0, %v656
      %v658 = vmul.f32 %v655, %v657
      %v659 = vadd.f32 %v655, %v658
      %vm660 = vweird.f32 %v549
      %vm661 = vweird.f32 %v655
      %vm662 = vmor %vm660, %vm661
      %v663 = vsel %vm662, %v655, %v659
      %v664 = vand.u32 2147483647, %v549
      %vm665 = vcmp.eq.f32.partialorder %v664, 8.507059e+37
      %v666 = vand.u32 %v549, 2147483648
      %v667 = vor.u32 1.1754944e-38, %v666
      %v668 = vsel %vm665, %v667, %v663
      %v669 = vmul.f32 1.0, %v668
      %v670 = vmul.f32 %v495, %v564
      %v671 = vmul.f32 %v498, %v579
      %v672 = vmul.f32 %v501, %v594
      %v673 = vmul.f32 %v504, %v609
      %v674 = vmul.f32 %v507, %v624
      %v675 = vmul.f32 %v510, %v639
      %v676 = vmul.f32 %v513, %v654
      %v677 = vmul.f32 %v516, %v669
      %678 = vmatpush.msra.mxu0 %v443
      %679 = vmatpush.msra.mxu0 %v442
      %680 = vmatpush.msra.mxu0 %v441
      %681 = vmatpush.msra.mxu0 %v440
      %682 = vmatpush.msra.mxu0 %v439
      %683 = vmatpush.msra.mxu0 %v438
      %684 = vmatpush.msra.mxu0 %v437
      %685 = vmatpush.msra.mxu0 %v436
      %686 = vmatpush.msra.mxu0 %v435
      %687 = vmatpush.msra.mxu0 %v434
      %688 = vmatpush.msra.mxu0 %v433
      %689 = vmatpush.msra.mxu0 %v432
      %690 = vmatpush.msra.mxu0 %v431
      %691 = vmatpush.msra.mxu0 %v430
      %692 = vmatpush.msra.mxu0 %v429
      %693 = vmatpush.msra.mxu0 %v428
      %694 = vmatmul.f32.gmra.mxu0 %v670
      %v695 = vpop.f32.mrf.mxu0
      %v696 = vadd.f32 0.0, %v695
      %697 = vmatmul.f32.gmra.mxu0 %v671
      %v698 = vpop.f32.mrf.mxu0
      %v699 = vadd.f32 0.0, %v698
      %700 = vmatmul.f32.gmra.mxu0 %v672
      %v701 = vpop.f32.mrf.mxu0
      %v702 = vadd.f32 0.0, %v701
      %703 = vmatmul.f32.gmra.mxu0 %v673
      %v704 = vpop.f32.mrf.mxu0
      %v705 = vadd.f32 0.0, %v704
      %706 = vmatmul.f32.gmra.mxu0 %v674
      %v707 = vpop.f32.mrf.mxu0
      %v708 = vadd.f32 0.0, %v707
      %709 = vmatmul.f32.gmra.mxu0 %v675
      %v710 = vpop.f32.mrf.mxu0
      %v711 = vadd.f32 0.0, %v710
      %712 = vmatmul.f32.gmra.mxu0 %v676
      %v713 = vpop.f32.mrf.mxu0
      %v714 = vadd.f32 0.0, %v713
      %715 = vmatmul.f32.gmra.mxu0 %v677
      %v716 = vpop.f32.mrf.mxu0
      %v717 = vadd.f32 0.0, %v716
      %718 = vdwg.mxu0
      %vm719 = vcmask 261120
      %v721 = vsel %vm719, %v417, 0
      %723 = vmatpush.msra.mxu0 0.0
      %724 = vmatpush.msra.mxu0 0.0
      %725 = vmatpush.msra.mxu0 0.0
      %726 = vmatpush.msra.mxu0 0.0
      %727 = vmatpush.msra.mxu0 0.0
      %728 = vmatpush.msra.mxu0 0.0
      %729 = vmatpush.msra.mxu0 0.0
      %730 = vmatpush.msra.mxu0 0.0
      %731 = vmatpush.msra.mxu0 0.0
      %732 = vmatpush.msra.mxu0 0.0
      %733 = vmatpush.msra.mxu0 0.0
      %734 = vmatpush.msra.mxu0 0.0
      %735 = vmatpush.msra.mxu0 %v448
      %736 = vmatpush.msra.mxu0 %v447
      %737 = vmatpush.msra.mxu0 %v446
      %738 = vmatpush.msra.mxu0 %v445
      %739 = vmatmul.f32.gmra.mxu0 %v721
      %v740 = vpop.f32.mrf.mxu0
      %v741 = vadd.f32 0.0, %v740
      %742 = vdwg.mxu0
      %744 = vrot.lane.b32.xlu0 %v741, 96
      %v745 = vpop.permute.xlu0 %744
      %747 = vrot.lane.b32.xlu0 %v741, 64
      %v748 = vpop.permute.xlu0 %747
      %750 = vrot.lane.b32.xlu0 %v741, 32
      %v751 = vpop.permute.xlu0 %750
      %v753 = vrot.slane %v748, 4
      %vm754 = vcmask 1047556
      %v755 = vsel %vm754, %v753, %v741
      %v756 = vrot.slane %v741, 4
      %v757 = vsel %vm754, %v748, %v756
      %v759 = vunpack.c.l.s4 1983009808
      %v760 = vunpack.c.0.s8 %v759
      %v761 = vperm.slane %v755, %v760
      %v763 = vunpack.c.l.s4 1983009808
      %v764 = vunpack.c.0.s8 %v763
      %v765 = vperm.slane %v757, %v764
      %v766 = vrot.slane %v751, 4
      %v767 = vsel %vm754, %v766, %v745
      %v768 = vrot.slane %v745, 4
      %v769 = vsel %vm754, %v751, %v768
      %v771 = vunpack.c.l.s4 1983009808
      %v772 = vunpack.c.0.s8 %v771
      %v773 = vperm.slane %v767, %v772
      %v775 = vunpack.c.l.s4 1983009808
      %v776 = vunpack.c.0.s8 %v775
      %v777 = vperm.slane %v769, %v776
      %v778 = vrot.slane %v773, 4
      %v779 = vsel %vm754, %v778, %v761
      %v780 = vrot.slane %v761, 4
      %v781 = vsel %vm754, %v773, %v780
      %v783 = vunpack.c.l.s4 1934713408
      %v784 = vunpack.c.0.s8 %v783
      %v785 = vperm.slane %v779, %v784
      %v787 = vunpack.c.l.s4 1934713408
      %v788 = vunpack.c.0.s8 %v787
      %v789 = vperm.slane %v781, %v788
      %v790 = vrot.slane %v777, 4
      %v791 = vsel %vm754, %v790, %v765
      %v792 = vrot.slane %v765, 4
      %v793 = vsel %vm754, %v777, %v792
      %v795 = vunpack.c.l.s4 1934713408
      %v796 = vunpack.c.0.s8 %v795
      %v797 = vperm.slane %v791, %v796
      %v799 = vunpack.c.l.s4 1934713408
      %v800 = vunpack.c.0.s8 %v799
      %v801 = vperm.slane %v793, %v800
      %v802 = vrot.slane %v785, 4
      %v803 = vsel %vm754, 0.0, %v802
      %v804 = vrot.slane %v789, 4
      %v805 = vsel %vm754, 0.0, %v804
      %v806 = vrot.slane %v797, 4
      %v807 = vsel %vm754, 0.0, %v806
      %v808 = vrot.slane %v801, 4
      %v809 = vsel %vm754, 0.0, %v808
      %v811 = vsel %vm719, %v418, 0
      %v814 = vsel %vm719, %v785, 0
      %816 = vmatpush.xpose.msra.mxu0 0.0
      %817 = vmatpush.xpose.msra.mxu0 0.0
      %818 = vmatpush.xpose.msra.mxu0 0.0
      %819 = vmatpush.xpose.msra.mxu0 0.0
      %820 = vmatpush.xpose.msra.mxu0 0.0
      %821 = vmatpush.xpose.msra.mxu0 0.0
      %822 = vmatpush.xpose.msra.mxu0 0.0
      %823 = vmatpush.xpose.msra.mxu0 0.0
      %824 = vmatpush.xpose.msra.mxu0 0.0
      %825 = vmatpush.xpose.msra.mxu0 0.0
      %826 = vmatpush.xpose.msra.mxu0 0.0
      %827 = vmatpush.xpose.msra.mxu0 0.0
      %828 = vmatpush.xpose.msra.mxu0 0.0
      %829 = vmatpush.xpose.msra.mxu0 0.0
      %830 = vmatpush.xpose.msra.mxu0 0.0
      %831 = vmatpush.xpose.msra.mxu0 %v814
      %832 = vmatmul.f32.gmra.mxu0 %v811
      %v833 = vpop.f32.mrf.mxu0
      %v834 = vadd.f32 0.0, %v833
      %835 = vdwg.mxu0
      %v837 = vsel %vm719, %v419, 0
      %v840 = vsel %vm719, %v803, 0
      %842 = vmatpush.xpose.msra.mxu0 0.0
      %843 = vmatpush.xpose.msra.mxu0 0.0
      %844 = vmatpush.xpose.msra.mxu0 0.0
      %845 = vmatpush.xpose.msra.mxu0 0.0
      %846 = vmatpush.xpose.msra.mxu0 0.0
      %847 = vmatpush.xpose.msra.mxu0 0.0
      %848 = vmatpush.xpose.msra.mxu0 0.0
      %849 = vmatpush.xpose.msra.mxu0 0.0
      %850 = vmatpush.xpose.msra.mxu0 0.0
      %851 = vmatpush.xpose.msra.mxu0 0.0
      %852 = vmatpush.xpose.msra.mxu0 0.0
      %853 = vmatpush.xpose.msra.mxu0 0.0
      %854 = vmatpush.xpose.msra.mxu0 0.0
      %855 = vmatpush.xpose.msra.mxu0 0.0
      %856 = vmatpush.xpose.msra.mxu0 0.0
      %857 = vmatpush.xpose.msra.mxu0 %v840
      %858 = vmatmul.f32.gmra.mxu0 %v837
      %v859 = vpop.f32.mrf.mxu0
      %v860 = vadd.f32 0.0, %v859
      %861 = vdwg.mxu0
      %v863 = vsel %vm719, %v420, 0
      %v866 = vsel %vm719, %v789, 0
      %868 = vmatpush.xpose.msra.mxu0 0.0
      %869 = vmatpush.xpose.msra.mxu0 0.0
      %870 = vmatpush.xpose.msra.mxu0 0.0
      %871 = vmatpush.xpose.msra.mxu0 0.0
      %872 = vmatpush.xpose.msra.mxu0 0.0
      %873 = vmatpush.xpose.msra.mxu0 0.0
      %874 = vmatpush.xpose.msra.mxu0 0.0
      %875 = vmatpush.xpose.msra.mxu0 0.0
      %876 = vmatpush.xpose.msra.mxu0 0.0
      %877 = vmatpush.xpose.msra.mxu0 0.0
      %878 = vmatpush.xpose.msra.mxu0 0.0
      %879 = vmatpush.xpose.msra.mxu0 0.0
      %880 = vmatpush.xpose.msra.mxu0 0.0
      %881 = vmatpush.xpose.msra.mxu0 0.0
      %882 = vmatpush.xpose.msra.mxu0 0.0
      %883 = vmatpush.xpose.msra.mxu0 %v866
      %884 = vmatmul.f32.gmra.mxu0 %v863
      %v885 = vpop.f32.mrf.mxu0
      %v886 = vadd.f32 0.0, %v885
      %887 = vdwg.mxu0
      %v889 = vsel %vm719, %v421, 0
      %v892 = vsel %vm719, %v805, 0
      %894 = vmatpush.xpose.msra.mxu0 0.0
      %895 = vmatpush.xpose.msra.mxu0 0.0
      %896 = vmatpush.xpose.msra.mxu0 0.0
      %897 = vmatpush.xpose.msra.mxu0 0.0
      %898 = vmatpush.xpose.msra.mxu0 0.0
      %899 = vmatpush.xpose.msra.mxu0 0.0
      %900 = vmatpush.xpose.msra.mxu0 0.0
      %901 = vmatpush.xpose.msra.mxu0 0.0
      %902 = vmatpush.xpose.msra.mxu0 0.0
      %903 = vmatpush.xpose.msra.mxu0 0.0
      %904 = vmatpush.xpose.msra.mxu0 0.0
      %905 = vmatpush.xpose.msra.mxu0 0.0
      %906 = vmatpush.xpose.msra.mxu0 0.0
      %907 = vmatpush.xpose.msra.mxu0 0.0
      %908 = vmatpush.xpose.msra.mxu0 0.0
      %909 = vmatpush.xpose.msra.mxu0 %v892
      %910 = vmatmul.f32.gmra.mxu0 %v889
      %v911 = vpop.f32.mrf.mxu0
      %v912 = vadd.f32 0.0, %v911
      %913 = vdwg.mxu0
      %v915 = vsel %vm719, %v422, 0
      %v918 = vsel %vm719, %v797, 0
      %920 = vmatpush.xpose.msra.mxu0 0.0
      %921 = vmatpush.xpose.msra.mxu0 0.0
      %922 = vmatpush.xpose.msra.mxu0 0.0
      %923 = vmatpush.xpose.msra.mxu0 0.0
      %924 = vmatpush.xpose.msra.mxu0 0.0
      %925 = vmatpush.xpose.msra.mxu0 0.0
      %926 = vmatpush.xpose.msra.mxu0 0.0
      %927 = vmatpush.xpose.msra.mxu0 0.0
      %928 = vmatpush.xpose.msra.mxu0 0.0
      %929 = vmatpush.xpose.msra.mxu0 0.0
      %930 = vmatpush.xpose.msra.mxu0 0.0
      %931 = vmatpush.xpose.msra.mxu0 0.0
      %932 = vmatpush.xpose.msra.mxu0 0.0
      %933 = vmatpush.xpose.msra.mxu0 0.0
      %934 = vmatpush.xpose.msra.mxu0 0.0
      %935 = vmatpush.xpose.msra.mxu0 %v918
      %936 = vmatmul.f32.gmra.mxu0 %v915
      %v937 = vpop.f32.mrf.mxu0
      %v938 = vadd.f32 0.0, %v937
      %939 = vdwg.mxu0
      %v941 = vsel %vm719, %v423, 0
      %v944 = vsel %vm719, %v807, 0
      %946 = vmatpush.xpose.msra.mxu0 0.0
      %947 = vmatpush.xpose.msra.mxu0 0.0
      %948 = vmatpush.xpose.msra.mxu0 0.0
      %949 = vmatpush.xpose.msra.mxu0 0.0
      %950 = vmatpush.xpose.msra.mxu0 0.0
      %951 = vmatpush.xpose.msra.mxu0 0.0
      %952 = vmatpush.xpose.msra.mxu0 0.0
      %953 = vmatpush.xpose.msra.mxu0 0.0
      %954 = vmatpush.xpose.msra.mxu0 0.0
      %955 = vmatpush.xpose.msra.mxu0 0.0
      %956 = vmatpush.xpose.msra.mxu0 0.0
      %957 = vmatpush.xpose.msra.mxu0 0.0
      %958 = vmatpush.xpose.msra.mxu0 0.0
      %959 = vmatpush.xpose.msra.mxu0 0.0
      %960 = vmatpush.xpose.msra.mxu0 0.0
      %961 = vmatpush.xpose.msra.mxu0 %v944
      %962 = vmatmul.f32.gmra.mxu0 %v941
      %v963 = vpop.f32.mrf.mxu0
      %v964 = vadd.f32 0.0, %v963
      %965 = vdwg.mxu0
      %v967 = vsel %vm719, %v424, 0
      %v970 = vsel %vm719, %v801, 0
      %972 = vmatpush.xpose.msra.mxu0 0.0
      %973 = vmatpush.xpose.msra.mxu0 0.0
      %974 = vmatpush.xpose.msra.mxu0 0.0
      %975 = vmatpush.xpose.msra.mxu0 0.0
      %976 = vmatpush.xpose.msra.mxu0 0.0
      %977 = vmatpush.xpose.msra.mxu0 0.0
      %978 = vmatpush.xpose.msra.mxu0 0.0
      %979 = vmatpush.xpose.msra.mxu0 0.0
      %980 = vmatpush.xpose.msra.mxu0 0.0
      %981 = vmatpush.xpose.msra.mxu0 0.0
      %982 = vmatpush.xpose.msra.mxu0 0.0
      %983 = vmatpush.xpose.msra.mxu0 0.0
      %984 = vmatpush.xpose.msra.mxu0 0.0
      %985 = vmatpush.xpose.msra.mxu0 0.0
      %986 = vmatpush.xpose.msra.mxu0 0.0
      %987 = vmatpush.xpose.msra.mxu0 %v970
      %988 = vmatmul.f32.gmra.mxu0 %v967
      %v989 = vpop.f32.mrf.mxu0
      %v990 = vadd.f32 0.0, %v989
      %991 = vdwg.mxu0
      %v993 = vsel %vm719, %v425, 0
      %v996 = vsel %vm719, %v809, 0
      %998 = vmatpush.xpose.msra.mxu0 0.0
      %999 = vmatpush.xpose.msra.mxu0 0.0
      %1000 = vmatpush.xpose.msra.mxu0 0.0
      %1001 = vmatpush.xpose.msra.mxu0 0.0
      %1002 = vmatpush.xpose.msra.mxu0 0.0
      %1003 = vmatpush.xpose.msra.mxu0 0.0
      %1004 = vmatpush.xpose.msra.mxu0 0.0
      %1005 = vmatpush.xpose.msra.mxu0 0.0
      %1006 = vmatpush.xpose.msra.mxu0 0.0
      %1007 = vmatpush.xpose.msra.mxu0 0.0
      %1008 = vmatpush.xpose.msra.mxu0 0.0
      %1009 = vmatpush.xpose.msra.mxu0 0.0
      %1010 = vmatpush.xpose.msra.mxu0 0.0
      %1011 = vmatpush.xpose.msra.mxu0 0.0
      %1012 = vmatpush.xpose.msra.mxu0 0.0
      %1013 = vmatpush.xpose.msra.mxu0 %v996
      %1014 = vmatmul.f32.gmra.mxu0 %v993
      %v1015 = vpop.f32.mrf.mxu0
      %v1016 = vadd.f32 0.0, %v1015
      %1017 = vdwg.mxu0
      %v1018 = vadd.f32 %v696, %v834
      %v1019 = vadd.f32 %v699, %v860
      %v1020 = vadd.f32 %v702, %v886
      %v1021 = vadd.f32 %v705, %v912
      %v1022 = vadd.f32 %v708, %v938
      %v1023 = vadd.f32 %v711, %v964
      %v1024 = vadd.f32 %v714, %v990
      %v1025 = vadd.f32 %v717, %v1016
      %v1027 = vperm.slane %v444, 0
      %v1029 = vadd.f32 %v1018, %v1027
      %v1030 = vadd.f32 %v1019, %v1027
      %v1031 = vadd.f32 %v1020, %v1027
      %v1032 = vadd.f32 %v1021, %v1027
      %v1033 = vadd.f32 %v1022, %v1027
      %v1034 = vadd.f32 %v1023, %v1027
      %v1035 = vadd.f32 %v1024, %v1027
      %v1036 = vadd.f32 %v1025, %v1027
      %vm1037 = vcmask 31744
      %1038 = vst.msk [vmem:[%s407] sm:$0xff] %vm1037, %v1029
      %1039 = vst.msk [vmem:[%s407 + $0x8] sm:$0xff] %vm1037, %v1030
      %1040 = vst.msk [vmem:[%s407 + $0x10] sm:$0xff] %vm1037, %v1031
      %1041 = vst.msk [vmem:[%s407 + $0x18] sm:$0xff] %vm1037, %v1032
      %1042 = vst.msk [vmem:[%s407 + $0x20] sm:$0xff] %vm1037, %v1033
      %1043 = vst.msk [vmem:[%s407 + $0x28] sm:$0xff] %vm1037, %v1034
      %1044 = vst.msk [vmem:[%s407 + $0x30] sm:$0xff] %vm1037, %v1035
      %1045 = vst.msk [vmem:[%s407 + $0x38] sm:$0xff] %vm1037, %v1036
      %s1046 = smul.u32 8, %s24
      %p1047 = scmp.lt.s32.totalorder %s23, 1
      %s1048 = scalar_select %p1047, %s23, 1
      %p1049 = scmp.lt.s32.totalorder %s1046, 7
      %s1050 = scalar_select %p1049, %s1046, 7
      %s1051 = smul.addr %s1048, 8
      %s1052 = sadd.s32 %s1050, %s1051
      %s1053 = smul.addr %s1052, 8
      %s1054 = scalar_lea.vmem %s8, %s1053
      // Predicated region
      $region53: #{tpu_custom_call.1} parent=51 // pred_check
        %p1055 = pneg %p240
      $region54: #{tpu_custom_call.1} parent=51 // pred_check_branch
        %1057 = sbr.rel (%p1055) target = $region56
      $region55: #{tpu_custom_call.1} parent=51 // pred_region
        %s1058 = smul.u32 8, %s24
      $region56: #{tpu_custom_call.1} parent=51 // pred_fallthru
        _
    $region52: #{tpu_custom_call.1} parent=5 // pred_fallthru
      _
    %p1059 = scmp.le.s32.totalorder 2, %s14
    // Predicated region
    $region57: #{tpu_custom_call.1} parent=5 // pred_check
      %p1060 = pneg %p1059
    $region58: #{tpu_custom_call.1} parent=5 // pred_check_branch
      %1062 = sbr.rel (%p1060) target = $region60
    $region59: #{tpu_custom_call.1} parent=5 // pred_region
      %s1063 = ssub.s32 %s14, 2
      // Predicated region
      $region61: #{tpu_custom_call.1} parent=59 // pred_check
        %p1064 = pneg %p246
      $region62: #{tpu_custom_call.1} parent=59 // pred_check_branch
        %1066 = sbr.rel (%p1064) target = $region64
      $region63: #{tpu_custom_call.1} parent=59 // pred_region
        %s1067 = smul.u32 8, %s26
        %p1068 = scmp.lt.s32.totalorder %s25, 1
        %s1069 = scalar_select %p1068, %s25, 1
        %p1070 = scmp.lt.s32.totalorder %s1067, 7
        %s1071 = scalar_select %p1070, %s1067, 7
        %s1072 = smul.addr %s1069, 8
        %s1073 = sadd.s32 %s1071, %s1072
        %s1074 = smul.addr %s1073, 8
        %s1075 = scalar_lea.vmem %s8, %s1074
      $region64: #{tpu_custom_call.1} parent=59 // pred_fallthru
        _
    $region60: #{tpu_custom_call.1} parent=5 // pred_fallthru
      _
  $region6: #{tpu_custom_call.1} parent=0 // loop_footer
    %s18 = sadd.s32 1, %s14
  $region7: #{tpu_custom_call.1} parent=0 // loop_footer_branch
    %13 = sbr.rel target = $region3
  $region8: #{tpu_custom_call.1} parent=0 // loop_exit
    _

</llo_original>
